<compile_context>
chip_gen: v6e
topology: v6e:2x2x1
jax: 0.10.0
libtpu: 0.0.40
codegen_flags: <defaults>
</compile_context>

<pallas_src>
import functools

import jax
import jax.numpy as jnp
from jax import lax
from jax.experimental import pallas as pl
from jax.experimental.pallas import tpu as pltpu


def _supcon_logz_kernel(row_ref, col_ref, out_ref, z_acc, *,
                        n_valid, tile_m, tile_n, inv_t, col_resident):
    i = pl.program_id(0)          # anchor (row) block   — "parallel"
    j = pl.program_id(1)          # contrast (col) block — "arbitrary" reduction

    @pl.when(j == 0)
    def _init():
        z_acc[...] = jnp.zeros_like(z_acc)

    if col_resident:
        # Whole contrast matrix lives in VMEM (constant index map); slice the
        # current contrast block out of it.
        c0 = pl.multiple_of(j * tile_n, tile_n)
        col = col_ref[pl.ds(c0, tile_n), :]
    else:
        col = col_ref[...]

    # Cosine-similarity tile: rows are already L2-normalized, contract the D
    # axis of both operands directly (no transpose), f32 MXU accumulation.
    cos = lax.dot_general(
        row_ref[...], col,
        dimension_numbers=(((1,), (1,)), ((), ())),
        preferred_element_type=jnp.float32)                 # (tile_m, tile_n)

    # Validity mask from O(tile) index vectors: drop diagonal + padded columns.
    row_idx = i * tile_m + lax.broadcasted_iota(jnp.int32, (tile_m, 1), 0)
    col_idx = j * tile_n + lax.broadcasted_iota(jnp.int32, (1, tile_n), 1)
    valid = jnp.logical_and(row_idx != col_idx, col_idx < n_valid)

    # Statically shifted softmax partition: cos <= 1 (plus tiny bf16 slack), so
    # exp(inv_t * (cos - 1)) <= ~1 — no online max / rescale needed.
    z_acc[...] += jnp.sum(
        jnp.where(valid, jnp.exp((cos - 1.0) * inv_t), 0.0),
        axis=1, keepdims=True)

    @pl.when(j == pl.num_programs(1) - 1)
    def _finalize():
        # log Z = inv_t + log( sum exp(logit - inv_t) ),   logit = cos * inv_t
        out_ref[...] = inv_t + jnp.log(z_acc[...])


def _round_up(x, m):
    return ((x + m - 1) // m) * m


def _vmem_capacity_bytes():
    try:
        return int(pltpu.get_tpu_info().vmem_capacity_bytes)
    except Exception:
        return 64 * 2**20        # conservative: v7x per-TensorCore VMEM


def _choose_tiling(N, D_pad, bytes_el, vmem_cap):
    """Returns (n_pad, tile_m, tile_n, col_resident)."""
    row_budget = int(0.25 * vmem_cap)   # double-buffered (tile_m, D_pad) tiles
    col_budget = int(0.45 * vmem_cap)   # resident contrast operand (x2 buffers)

    if N <= 1024:
        # Small/medium: pad to a multiple of 16 and split into exactly 2+ row
        # blocks so the v7x megacore (2 TCs) is never half-idle.
        n_pad = _round_up(max(N, 16), 16)
        tile_m = n_pad // 2
        while (tile_m > 8
               and 2 * tile_m * D_pad * bytes_el > row_budget
               and (tile_m // 2) % 8 == 0
               and n_pad % (tile_m // 2) == 0):
            tile_m //= 2
        tile_n = tile_m
    else:
        # Large: 256-wide contrast blocks (MXU-aligned), anchor blocks as large
        # as VMEM allows (arithmetic intensity of the col stream = tile_m).
        tile_n = 256
        n_pad = _round_up(N, tile_n)
        tile_m = tile_n
        for cand in (1024, 512):
            if n_pad % cand == 0 and 2 * cand * D_pad * bytes_el <= row_budget:
                tile_m = cand
                break

    col_resident = 2 * n_pad * D_pad * bytes_el <= col_budget
    return n_pad, tile_m, tile_n, col_resident


def _vmem_limit(n_pad, tile_m, tile_n, D_pad, bytes_el, col_resident, vmem_cap):
    row = 2 * tile_m * D_pad * bytes_el
    col = 2 * (n_pad if col_resident else tile_n) * D_pad * bytes_el
    outs = 3 * tile_m * 128 * 4                 # out block (x2) + z_acc scratch
    tmp = 6 * tile_m * tile_n * 4               # (tile_m, tile_n) f32 temporaries
    need = row + col + outs + tmp
    limit = int(1.3 * need) + (4 << 20)
    return int(min(max(limit, 16 * 2**20), int(0.75 * vmem_cap)))


def supcon_loss(features, temperature=0.07, base_temperature=0.07,
                matmul_dtype=jnp.bfloat16):
    """features: [bsz, n_views, ...] -> scalar SimCLR-style SupCon loss."""
    if features.ndim < 3:
        raise ValueError('`features` needs to be [bsz, n_views, ...]')
    bsz, n_views = features.shape[0], features.shape[1]
    feat = features.reshape(bsz, n_views, -1).astype(jnp.float32)
    # torch.cat(torch.unbind(features, dim=1), dim=0)  ->  view-major stack
    contrast = jnp.transpose(feat, (1, 0, 2)).reshape(n_views * bsz, -1)
    N, D = contrast.shape

    # Cosine similarity == dot of row-normalized features (clamp ~ PyTorch eps).
    sq = jnp.sum(contrast * contrast, axis=-1, keepdims=True)
    f_hat = contrast * lax.rsqrt(jnp.maximum(sq, 1e-16))

    inv_t = 1.0 / float(temperature)

    # Positive-pair numerator hoisted out of the kernel (O(N*D*(V-1)) in XLA):
    # in view-major order the positives of row r are rows (r + k*bsz) mod N,
    # k = 1..n_views-1, and d == n_views - 1 is a compile-time constant.
    pos_sum = jnp.zeros((N,), jnp.float32)
    for k in range(1, n_views):
        pos_sum = pos_sum + jnp.sum(
            f_hat * jnp.roll(f_hat, shift=-k * bsz, axis=0), axis=-1)
    denom = float(max(n_views - 1, 1))
    mean_pos_logit = pos_sum * (inv_t / denom)

    # MXU operand: cast to matmul dtype, D zero-padded to a lane-aligned
    # multiple of 128 (padding zeros do not change dot products).
    f_mx = f_hat.astype(matmul_dtype)
    bytes_el = jnp.dtype(matmul_dtype).itemsize
    D_pad = _round_up(max(D, 128), 128)
    if D_pad != D:
        f_mx = jnp.pad(f_mx, ((0, 0), (0, D_pad - D)))

    vmem_cap = _vmem_capacity_bytes()
    n_pad, tile_m, tile_n, col_resident = _choose_tiling(N, D_pad, bytes_el,
                                                         vmem_cap)
    if n_pad != N:
        f_mx = jnp.pad(f_mx, ((0, n_pad - N), (0, 0)))

    grid = (n_pad // tile_m, n_pad // tile_n)

    if col_resident:
        # Constant index map -> contrast matrix DMA'd from HBM exactly once.
        col_spec = pl.BlockSpec((n_pad, D_pad), lambda i, j: (0, 0))
    else:
        col_spec = pl.BlockSpec((tile_n, D_pad), lambda i, j: (j, 0))

    kernel = functools.partial(
        _supcon_logz_kernel,
        n_valid=N, tile_m=tile_m, tile_n=tile_n,
        inv_t=inv_t, col_resident=col_resident)

    log_z = pl.pallas_call(
        kernel,
        out_shape=jax.ShapeDtypeStruct((n_pad, 1), jnp.float32),
        grid_spec=pltpu.PrefetchScalarGridSpec(
            num_scalar_prefetch=0,
            grid=grid,
            in_specs=[
                pl.BlockSpec((tile_m, D_pad), lambda i, j: (i, 0)),  # anchors
                col_spec,                                            # contrast
            ],
            out_specs=pl.BlockSpec((tile_m, 1), lambda i, j: (i, 0)),
            scratch_shapes=[pltpu.VMEM((tile_m, 1), jnp.float32)],
        ),
        compiler_params=pltpu.CompilerParams(
            dimension_semantics=("parallel", "arbitrary"),
            vmem_limit_bytes=_vmem_limit(n_pad, tile_m, tile_n, D_pad,
                                         bytes_el, col_resident, vmem_cap),
        ),
    )(f_mx, f_mx)

    # loss_r = -(T/base_T) * ( (Σ_pos logit)/d - log Z ); padded rows dropped.
    loss_scale = float(temperature) / float(base_temperature)
    loss_per_anchor = -loss_scale * (mean_pos_logit - log_z[:N, 0])
    # Matches loss.view(anchor_count, batch_size).mean() in the PyTorch module.
    return jnp.mean(loss_per_anchor)


def _supcon_loss_ref(features, temperature=0.07, base_temperature=0.07):
    """Pure-JAX reference mirroring the PyTorch forward (SimCLR default path)."""
    bsz, n_views = features.shape[0], features.shape[1]
    feat = features.reshape(bsz, n_views, -1).astype(jnp.float32)
    contrast = jnp.transpose(feat, (1, 0, 2)).reshape(n_views * bsz, -1)
    N = contrast.shape[0]
    norm = jnp.sqrt(jnp.sum(contrast * contrast, axis=-1, keepdims=True))
    cos = (contrast @ contrast.T) / jnp.maximum(norm * norm.T, 1e-8)
    logits = cos / temperature
    eye = jnp.eye(N, dtype=jnp.float32)
    logits_mask = 1.0 - eye
    mask = jnp.tile(jnp.eye(bsz, dtype=jnp.float32), (n_views, n_views)) * logits_mask
    exp_logits = jnp.exp(logits) * logits_mask
    log_prob = logits - jnp.log(jnp.sum(exp_logits, axis=1, keepdims=True))
    mean_log_prob_pos = jnp.sum(mask * log_prob, axis=1) / jnp.sum(mask, axis=1)
    loss = -(temperature / base_temperature) * mean_log_prob_pos
    return jnp.mean(loss)


if __name__ == "__main__":
    key = jax.random.PRNGKey(0)
    # features: [bsz=4, n_views=2, c=4, s=8]  (flattened to D=32 inside)
    features = jax.random.normal(key, (4, 2, 4, 8), dtype=jnp.float32)

    ref = jax.block_until_ready(_supcon_loss_ref(features))

    # Default fast path: bf16 MXU inputs, f32 accumulation / softmax math.
    loss_bf16 = jax.block_until_ready(supcon_loss(features))
    assert jnp.allclose(loss_bf16, ref, rtol=5e-2, atol=5e-2), (loss_bf16, ref)

    # Full-f32 matmul path (tighter check of the shifted-softmax reduction).
    loss_f32 = jax.block_until_ready(supcon_loss(features, matmul_dtype=jnp.float32))
    assert jnp.allclose(loss_f32, ref, rtol=2e-2, atol=2e-2), (loss_f32, ref)

    print("KERNEL_OK")
</pallas_src>

<mosaic_0001>
module attributes {stable_mosaic.version = 11 : i64} {
  func.func @_supcon_logz_kernel(%arg0: i32, %arg1: i32, %arg2: memref<8x128xbf16, #tpu.memory_space<vmem>>, %arg3: memref<16x128xbf16, #tpu.memory_space<vmem>>, %arg4: memref<8x1xf32, #tpu.memory_space<vmem>>, %arg5: memref<8x1xf32, #tpu.memory_space<vmem>>) attributes {dimension_semantics = [#tpu.dimension_semantics<parallel>, #tpu.dimension_semantics<arbitrary>], iteration_bounds = array<i64: 2, 2>, scalar_prefetch = 0 : i64, scratch_operands = 1 : i64, tpu.core_type = #tpu.core_type<tc>, window_params = [{transform_indices = @transform_0, window_bounds = array<i64: 8, 128>}, {pipeline_mode = #tpu.pipeline_mode<synchronous>, transform_indices = @transform_1, window_bounds = array<i64: 16, 128>}, {transform_indices = @transform_2, window_bounds = array<i64: 8, 1>}]} {
    %c0_i32 = arith.constant 0 : i32
    %0 = arith.cmpi eq, %arg1, %c0_i32 : i32
    %1 = arith.extui %0 : i1 to i32
    %c0_i32_0 = arith.constant 0 : i32
    %2 = arith.cmpi ne, %1, %c0_i32_0 : i32
    scf.if %2 {
      %cst_15 = arith.constant 0.000000e+00 : f32
      %39 = vector.broadcast %cst_15 : f32 to vector<8x1xf32>
      %c0_16 = arith.constant 0 : index
      %c0_17 = arith.constant 0 : index
      %40 = vector.load %arg5[%c0_16, %c0_17] : memref<8x1xf32, #tpu.memory_space<vmem>>, vector<8x1xf32>
      tpu.vector_store %arg5[%c0_16, %c0_17], %39 {strides = array<i32>} : memref<8x1xf32, #tpu.memory_space<vmem>>, vector<8x1xf32>,
    } else {
    }
    %c8_i32 = arith.constant 8 : i32
    %3 = arith.muli %arg1, %c8_i32 : i32
    %4 = tpu.assume_multiple %3, 8 : i32
    %5 = arith.index_cast %4 : i32 to index
    %c0 = arith.constant 0 : index
    %6 = vector.load %arg3[%5, %c0] : memref<16x128xbf16, #tpu.memory_space<vmem>>, vector<8x128xbf16>
    %c0_1 = arith.constant 0 : index
    %c0_2 = arith.constant 0 : index
    %7 = vector.load %arg2[%c0_1, %c0_2] : memref<8x128xbf16, #tpu.memory_space<vmem>>, vector<8x128xbf16>
    %cst = arith.constant dense<0.000000e+00> : vector<8x8xf32>
    %8 = tpu.matmul %7, %6, %cst {dimension_numbers = #tpu.dot_dimension_numbers<[1], [1], [0], [0], [0, 0, 1, 0], [], []>} : vector<8x128xbf16>, vector<8x128xbf16>, vector<8x8xf32> -> vector<8x8xf32>
    %c8_i32_3 = arith.constant 8 : i32
    %9 = arith.muli %arg0, %c8_i32_3 : i32
    %10 = tpu.iota {dimensions = array<i32: 0>} : vector<8x1xi32>
    %11 = vector.broadcast %9 : i32 to vector<8x1xi32>
    %12 = arith.addi %11, %10 : vector<8x1xi32>
    %c8_i32_4 = arith.constant 8 : i32
    %13 = arith.muli %arg1, %c8_i32_4 : i32
    %14 = tpu.iota {dimensions = array<i32: 1>} : vector<1x8xi32>
    %15 = vector.broadcast %13 : i32 to vector<1x8xi32>
    %16 = arith.addi %15, %14 : vector<1x8xi32>
    %17 = vector.broadcast %12 : vector<8x1xi32> to vector<8x8xi32>
    %18 = vector.broadcast %16 : vector<1x8xi32> to vector<8x8xi32>
    %19 = arith.cmpi ne, %17, %18 : vector<8x8xi32>
    %c8_i32_5 = arith.constant 8 : i32
    %20 = vector.broadcast %c8_i32_5 : i32 to vector<1x8xi32>
    %21 = arith.cmpi slt, %16, %20 : vector<1x8xi32>
    %22 = vector.broadcast %21 : vector<1x8xi1> to vector<8x8xi1>
    %23 = arith.andi %19, %22 : vector<8x8xi1>
    %c0_6 = arith.constant 0 : index
    %c0_7 = arith.constant 0 : index
    %24 = vector.load %arg5[%c0_6, %c0_7] : memref<8x1xf32, #tpu.memory_space<vmem>>, vector<8x1xf32>
    %cst_8 = arith.constant 1.000000e+00 : f32
    %25 = vector.broadcast %cst_8 : f32 to vector<8x8xf32>
    %26 = arith.subf %8, %25 : vector<8x8xf32>
    %cst_9 = arith.constant 14.2857141 : f32
    %27 = vector.broadcast %cst_9 : f32 to vector<8x8xf32>
    %28 = arith.mulf %26, %27 : vector<8x8xf32>
    %29 = math.exp %28 : vector<8x8xf32>
    %cst_10 = arith.constant 0.000000e+00 : f32
    %30 = vector.broadcast %cst_10 : f32 to vector<8x8xf32>
    %31 = arith.select %23, %29, %30 : vector<8x8xi1>, vector<8x8xf32>
    %cst_11 = arith.constant dense<0.000000e+00> : vector<8xf32>
    %32 = vector.multi_reduction <add>, %31, %cst_11 [1] : vector<8x8xf32> to vector<8xf32>
    %33 = vector.shape_cast %32 : vector<8xf32> to vector<8x1xf32>
    %34 = arith.addf %24, %33 : vector<8x1xf32>
    %c0_12 = arith.constant 0 : index
    %c0_13 = arith.constant 0 : index
    %35 = vector.load %arg5[%c0_12, %c0_13] : memref<8x1xf32, #tpu.memory_space<vmem>>, vector<8x1xf32>
    tpu.vector_store %arg5[%c0_12, %c0_13], %34 {strides = array<i32>} : memref<8x1xf32, #tpu.memory_space<vmem>>, vector<8x1xf32>,
    %c1_i32 = arith.constant 1 : i32
    %36 = arith.cmpi eq, %arg1, %c1_i32 : i32
    %37 = arith.extui %36 : i1 to i32
    %c0_i32_14 = arith.constant 0 : i32
    %38 = arith.cmpi ne, %37, %c0_i32_14 : i32
    scf.if %38 {
      %c0_15 = arith.constant 0 : index
      %c0_16 = arith.constant 0 : index
      %39 = vector.load %arg5[%c0_15, %c0_16] : memref<8x1xf32, #tpu.memory_space<vmem>>, vector<8x1xf32>
      %40 = math.log %39 : vector<8x1xf32>
      %cst_17 = arith.constant 14.2857141 : f32
      %41 = vector.broadcast %cst_17 : f32 to vector<8x1xf32>
      %42 = arith.addf %41, %40 : vector<8x1xf32>
      %c0_18 = arith.constant 0 : index
      %c0_19 = arith.constant 0 : index
      %43 = vector.load %arg4[%c0_18, %c0_19] : memref<8x1xf32, #tpu.memory_space<vmem>>, vector<8x1xf32>
      tpu.vector_store %arg4[%c0_18, %c0_19], %42 {strides = array<i32>} : memref<8x1xf32, #tpu.memory_space<vmem>>, vector<8x1xf32>,
    } else {
    }
    return
  }
  func.func @transform_0(%arg0: i32, %arg1: i32) -> (i32, i32) {
    %c0_i32 = arith.constant 0 : i32
    %c0_i32_0 = arith.constant 0 : i32
    return %arg0, %c0_i32 : i32, i32
  }
  func.func @transform_1(%arg0: i32, %arg1: i32) -> (i32, i32) {
    %c0_i32 = arith.constant 0 : i32
    %c0_i32_0 = arith.constant 0 : i32
    %c0_i32_1 = arith.constant 0 : i32
    return %c0_i32, %c0_i32_0 : i32, i32
  }
  func.func @transform_2(%arg0: i32, %arg1: i32) -> (i32, i32) {
    %c0_i32 = arith.constant 0 : i32
    %c0_i32_0 = arith.constant 0 : i32
    return %arg0, %c0_i32 : i32, i32
  }
}

</mosaic_0001>

<llo_original>
// kernel: tpu_custom_call.1
$region0: #{tpu_custom_call.1}
  #allocation0 [shape = 'u32[]', space=smem, size = 0x4, offset = 0x4, fixed_abs, tag = 'smem constant byte address 0x4 - core index']
  #allocation1 [shape = 'u32[144,128]{1,0:T(1,128)}', space=vmem, size = 0x12000, scoped, tag = 'internal scratch']
  #allocation2 [shape = 'f32[8,1]{1,0:T(8,128)}', space=vmem, size = 0x1000, scoped, tag = 'scratch operand']
  %s0 = inlined_call_operand.hbm [shape: bf16[16,128], index: 0, kind: input, shape index: {}]
  %s1 = inlined_call_operand.hbm [shape: bf16[16,128], index: 1, kind: input, shape index: {}]
  %s2 = inlined_call_operand.vmem [shape: f32[16,1], index: 2, kind: output, shape index: {}]
  %s3 = sld [smem:[#allocation0]]
  $region57: #{tpu_custom_call.1} parent=0
    _
  %s5 = ssub.s32 1, %s3
  %s6 = scalar_select 0, %s5, %s3
  $region1: #{tpu_custom_call.1} parent=0
    #allocation3 [shape = 'u8[4096]{0}', space=vmem, size = 0x1000, scoped, tag = 'input window, operand 0']
    #allocation4 [shape = 's32[2]{0}', space=sflag, size = 0x8, scoped, tag = 'scoped memory for tpu_custom_call.1']
    #allocation5 [shape = 'u8[4096]{0}', space=vmem, size = 0x1000, scoped, tag = 'input window, operand 1, single buffered']
    #allocation6 [shape = 's32[1]{0}', space=sflag, size = 0x4, scoped, tag = 'scoped memory for tpu_custom_call.1']
    %7 = vsyncpa [#allocation4], 0
    %s8 = scalar_lea.sflag [#allocation4], 1
    %9 = vsyncpa %s8, 0
    %10 = vsyncpa [#allocation6], 0
    loop: start=0, step=1, limit=6
    $region2: #{tpu_custom_call.1} parent=1 // loop_pre_header
      _
    $region3: #{tpu_custom_call.1} parent=1 // loop_header
      %s12 = sphi 0, %s16
      %p13 = scmp.ge.s32.totalorder %s12, 6
      %s19 = sphi 0, %s31
      %s20 = sphi 0, %s27
      %s21 = sphi 0, %s19
      %s22 = sphi 0, %s20
      %s23 = sphi 0, %s21
      %s24 = sphi 0, %s22
      %s34 = sphi 0, %s36
      %s37 = sphi 0, %s34
      %s38 = sphi 0, %s37
      %s54 = sphi 0, %s38
      %s58 = sphi 0, %s58
      %s60 = sphi 0, %s58
      %s61 = sphi 0, %s60
      %s75 = sphi 0, %s61
      %s81 = sphi 0, %s83
      %s84 = sphi 0, %s81
      %s85 = sphi 0, %s84
      %s101 = sphi 0, %s85
    $region4: #{tpu_custom_call.1} parent=1 // loop_header_branch
      %15 = sbr.rel (%p13) target = $region8
    $region5: #{tpu_custom_call.1} parent=1 // loop_body
      %s17 = ssub.s32 %s12, 1
      %s18 = ssub.s32 %s12, 2
      %s25 = sadd.s32 1, %s20
      %p26 = scmp.ge.s32.totalorder %s25, 2
      %s27 = scalar_select %p26, 0, %s25
      %s28 = sadd.s32 1, %s19
      %s29 = scalar_select %p26, %s28, %s19
      %p30 = scmp.ge.s32.totalorder %s29, 2
      %s31 = scalar_select %p30, 0, %s29
      %s32 = ssub.s32 %s19, %s31
      %p33 = scmp.eq.s32.totalorder %s32, 0
      %s35 = sadd.s32 %s34, 1
      %s36 = scalar_select %p33, %s34, %s35
      %p39 = pneg %p33
      %p40 = scmp.eq.s32.totalorder %s12, 3
      %p41 = por %p39, %p40
      %p42 = scmp.ne.s32.totalorder %s34, %s37
      %p43 = scmp.eq.s32.totalorder %s12, 0
      %p44 = por %p42, %p43
      %p45 = scmp.ne.s32.totalorder %s34, %s37
      %p46 = scmp.eq.s32.totalorder %s17, 3
      %p47 = por %p45, %p46
      %p48 = scmp.ne.s32.totalorder %s37, %s38
      %p49 = scmp.eq.s32.totalorder %s17, 0
      %p50 = por %p48, %p49
      %p51 = scmp.ne.s32.totalorder %s37, %s38
      %p52 = scmp.eq.s32.totalorder %s18, 3
      %p53 = por %p51, %p52
      %p55 = scmp.ne.s32.totalorder %s38, %s54
      %p56 = scmp.eq.s32.totalorder %s18, 0
      %p57 = por %p55, %p56
      %s59 = sadd.s32 %s58, 1
      %p62 = scmp.eq.s32.totalorder %s12, 3
      %p63 = scmp.ne.s32.totalorder %s58, %s60
      %p64 = scmp.eq.s32.totalorder %s12, 0
      %p65 = por %p63, %p64
      %p66 = scmp.ne.s32.totalorder %s58, %s60
      %p67 = scmp.eq.s32.totalorder %s17, 3
      %p68 = por %p66, %p67
      %p69 = scmp.ne.s32.totalorder %s60, %s61
      %p70 = scmp.eq.s32.totalorder %s17, 0
      %p71 = por %p69, %p70
      %p72 = scmp.ne.s32.totalorder %s60, %s61
      %p73 = scmp.eq.s32.totalorder %s18, 3
      %p74 = por %p72, %p73
      %p76 = scmp.ne.s32.totalorder %s61, %s75
      %p77 = scmp.eq.s32.totalorder %s18, 0
      %p78 = por %p76, %p77
      %s79 = ssub.s32 %s19, %s31
      %p80 = scmp.eq.s32.totalorder %s79, 0
      %s82 = sadd.s32 %s81, 1
      %s83 = scalar_select %p80, %s81, %s82
      %p86 = pneg %p80
      %p87 = scmp.eq.s32.totalorder %s12, 3
      %p88 = por %p86, %p87
      %p89 = scmp.ne.s32.totalorder %s81, %s84
      %p90 = scmp.eq.s32.totalorder %s12, 0
      %p91 = por %p89, %p90
      %p92 = scmp.ne.s32.totalorder %s81, %s84
      %p93 = scmp.eq.s32.totalorder %s17, 3
      %p94 = por %p92, %p93
      %p95 = scmp.ne.s32.totalorder %s84, %s85
      %p96 = scmp.eq.s32.totalorder %s17, 0
      %p97 = por %p95, %p96
      %p98 = scmp.ne.s32.totalorder %s84, %s85
      %p99 = scmp.eq.s32.totalorder %s18, 3
      %p100 = por %p98, %p99
      %p102 = scmp.ne.s32.totalorder %s85, %s101
      %p103 = scmp.eq.s32.totalorder %s18, 0
      %p104 = por %p102, %p103
      %p105 = scmp.le.s32.totalorder 1, %s12
      %p106 = scmp.lt.s32.totalorder %s12, 5
      %p107 = pnand %p105, %p106
      %p108 = pneg %p107
      // Predicated region
      $region9: #{tpu_custom_call.1} parent=5 // pred_check
        _
      $region10: #{tpu_custom_call.1} parent=5 // pred_check_branch
        %110 = sbr.rel (%p107) target = $region12
      $region11: #{tpu_custom_call.1} parent=5 // pred_region
        %s111 = ssub.s32 %s12, 1
        // Predicated region
        $region13: #{tpu_custom_call.1} parent=11 // pred_check
          %p112 = pneg %p71
        $region14: #{tpu_custom_call.1} parent=11 // pred_check_branch
          %114 = sbr.rel (%p112) target = $region16
        $region15: #{tpu_custom_call.1} parent=11 // pred_region
          %s116 = ssub.s32 128, 128
          %117 = vsyncadd [#allocation6], %s116
          %s118 = sshll.u32 [#allocation5], 4
          %s119 = int_to_ptr.vmem [resolvable:$true] %s118
          %124 = dma.hbm_to_vmem [thread:$0]  %s1, 128, %s119, [#allocation6], 64, 64, 4
        $region16: #{tpu_custom_call.1} parent=11 // pred_fallthru
          _
      $region12: #{tpu_custom_call.1} parent=5 // pred_fallthru
        _
      %p125 = scmp.lt.s32.totalorder %s12, 4
      // Predicated region
      $region17: #{tpu_custom_call.1} parent=5 // pred_check
        %p126 = pneg %p125
      $region18: #{tpu_custom_call.1} parent=5 // pred_check_branch
        %128 = sbr.rel (%p126) target = $region20
      $region19: #{tpu_custom_call.1} parent=5 // pred_region
        // Predicated region
        $region21: #{tpu_custom_call.1} parent=19 // pred_check
          %p129 = pneg %p44
        $region22: #{tpu_custom_call.1} parent=19 // pred_check_branch
          %131 = sbr.rel (%p129) target = $region24
        $region23: #{tpu_custom_call.1} parent=19 // pred_region
          %s132 = sand.u32 %s34, 1
          %s133 = scalar_lea.sflag [#allocation4], %s132
          %s134 = sand.u32 %s34, 1
          %s135 = smul.addr %s134, 4
          %s136 = scalar_lea.vmem [#allocation3], %s135
          %s138 = ssub.s32 64, 64
          %139 = vsyncadd %s133, %s138
          %s140 = smul.addr %s19, 64
          %s141 = scalar_lea.hbm %s0, %s140
          %s143 = sshll.u32 %s136, 4
          %s144 = int_to_ptr.vmem [resolvable:$true] %s143
          %146 = dma.hbm_to_vmem [thread:$0]  %s141, 64, %s144, %s133
        $region24: #{tpu_custom_call.1} parent=19 // pred_fallthru
          _
      $region20: #{tpu_custom_call.1} parent=5 // pred_fallthru
        _
      %p147 = scmp.le.s32.totalorder 1, %s12
      %p148 = scmp.lt.s32.totalorder %s12, 5
      %p149 = pnand %p147, %p148
      %p150 = pneg %p149
      // Predicated region
      $region25: #{tpu_custom_call.1} parent=5 // pred_check
        _
      $region26: #{tpu_custom_call.1} parent=5 // pred_check_branch
        %152 = sbr.rel (%p149) target = $region28
      $region27: #{tpu_custom_call.1} parent=5 // pred_region
        %s153 = ssub.s32 %s12, 1
        %s154 = sand.u32 %s37, 1
        %s155 = scalar_lea.sflag [#allocation4], %s154
        %s156 = sand.u32 %s37, 1
        %s157 = smul.addr %s156, 4
        %s158 = scalar_lea.vmem [#allocation3], %s157
        // Predicated region
        $region29: #{tpu_custom_call.1} parent=27 // pred_check
          %p159 = pneg %p50
        $region30: #{tpu_custom_call.1} parent=27 // pred_check_branch
          %161 = sbr.rel (%p159) target = $region32
        $region31: #{tpu_custom_call.1} parent=27 // pred_region
          %162 = dma.done %s155, 64
        $region32: #{tpu_custom_call.1} parent=27 // pred_fallthru
          _
        // Predicated region
        $region33: #{tpu_custom_call.1} parent=27 // pred_check
          %p163 = pneg %p71
        $region34: #{tpu_custom_call.1} parent=27 // pred_check_branch
          %165 = sbr.rel (%p163) target = $region36
        $region35: #{tpu_custom_call.1} parent=27 // pred_region
          %166 = dma.done [#allocation6], 128
        $region36: #{tpu_custom_call.1} parent=27 // pred_fallthru
          _
        %s167 = sand.u32 %s37, 1
        %s168 = scalar_lea.sflag [#allocation4], %s167
        %s169 = sand.u32 %s37, 1
        %s170 = smul.addr %s169, 4
        %s171 = scalar_lea.vmem [#allocation3], %s170
        %p172 = pneg %p50
        %p173 = pneg %p47
        %p174 = pneg %p71
        %p175 = pneg %p68
        %p176 = pneg %p97
        %p177 = pneg %p94
        %p178 = scmp.lt.s32.totalorder %s21, 1
        %s179 = scalar_select %p178, %s21, 1
        %s180 = smul.addr %s179, 8
        %s181 = scalar_lea.vmem %s2, %s180
        %p182 = scmp.lt.s32.totalorder %s21, 1
        %s183 = scalar_select %p182, %s21, 1
        %s184 = smul.addr %s183, 8
        %s185 = scalar_lea.vmem %s2, %s184
        %p187 = scmp.eq.s32.totalorder %s22, 0
        // Predicated region
        $region37: #{tpu_custom_call.1} parent=27 // pred_check
          %p188 = pneg %p187
        $region38: #{tpu_custom_call.1} parent=27 // pred_check_branch
          %190 = sbr.rel (%p188) target = $region40
        $region39: #{tpu_custom_call.1} parent=27 // pred_region
          %vm191 = vcmask 7168
          %192 = vst.msk [vmem:[#allocation2] sm:$0xff] %vm191, 0.0
        $region40: #{tpu_custom_call.1} parent=27 // pred_fallthru
          _
        %s193 = smul.u32 %s22, 8
        %s194 = sshra.s32 %s193, 3
        %s195 = sand.u32 %s193, 7
        %s196 = smul.addr %s194, 4
        %s197 = scalar_lea.vmem [#allocation5], %s196
        %v198 = vld [vmem:[%s197] sm:$0xf]
        %v199 = vld [vmem:[%s158] sm:$0xf]
        %200 = vmatprep.subr.bf16.mxu0 0
        %201 = vmatpush1.bf16.xpose.msra.mxu0 0
        %202 = vmatprep.subr.bf16.mxu0 0
        %203 = vmatpush1.bf16.xpose.msra.mxu0 0
        %204 = vmatprep.subr.bf16.mxu0 0
        %205 = vmatpush1.bf16.xpose.msra.mxu0 0
        %206 = vmatprep.subr.bf16.mxu0 0
        %207 = vmatpush1.bf16.xpose.msra.mxu0 0
        %208 = vmatprep.subr.bf16.mxu0 0
        %209 = vmatpush1.bf16.xpose.msra.mxu0 0
        %210 = vmatprep.subr.bf16.mxu0 0
        %211 = vmatpush1.bf16.xpose.msra.mxu0 0
        %212 = vmatprep.subr.bf16.mxu0 0
        %213 = vmatpush1.bf16.xpose.msra.mxu0 0
        %214 = vmatprep.subr.bf16.mxu0 0
        %215 = vmatpush1.bf16.xpose.msra.mxu0 %v198
        %216 = vmatprep.subr.bf16.mxu0 0
        %217 = vmatpush2.bf16.xpose.msra.mxu0 0
        %218 = vmatprep.subr.bf16.mxu0 0
        %219 = vmatpush2.bf16.xpose.msra.mxu0 0
        %220 = vmatprep.subr.bf16.mxu0 0
        %221 = vmatpush2.bf16.xpose.msra.mxu0 0
        %222 = vmatprep.subr.bf16.mxu0 0
        %223 = vmatpush2.bf16.xpose.msra.mxu0 0
        %224 = vmatprep.subr.bf16.mxu0 0
        %225 = vmatpush2.bf16.xpose.msra.mxu0 0
        %226 = vmatprep.subr.bf16.mxu0 0
        %227 = vmatpush2.bf16.xpose.msra.mxu0 0
        %228 = vmatprep.subr.bf16.mxu0 0
        %229 = vmatpush2.bf16.xpose.msra.mxu0 0
        %230 = vmatprep.subr.bf16.mxu0 0
        %231 = vmatpush2.bf16.xpose.msra.mxu0 0
        %232 = vmatprep.mubr.bf16.mxu0 0
        %233 = vmatmul.mubr.bf16.gmra.mxu0 %v199
        %v234 = vpop.f32.mrf.mxu0
        %v235 = vadd.f32 0.0, %v234
        %v236 = vpop.f32.mrf.mxu0
        %v237 = vpop.f32.mrf.mxu0
        %v238 = vpop.f32.mrf.mxu0
        %239 = vdwg.mxu0
        %s240 = smul.u32 %s21, 8
        %v241 = vlaneseq
        %v242 = vshrl.u32 %v241, 7
        %v243 = vstv %s240
        %v244 = vadd.s32 %v243, %v242
        %v245 = vlaneseq
        %v246 = vand.u32 %v245, 127
        %v247 = vstv %s193
        %v248 = vadd.s32 %v247, %v246
        %vm249 = vcmp.ne.s32.totalorder %v244, %v248
        %vm250 = vcmp.lt.s32.totalorder %v248, 8
        %v251 = vsel %vm250, 1, 0
        %vm252 = vcmp.eq.s32.totalorder %v251, 1
        %vm253 = vmand %vm249, %vm252
        %v254 = vld [vmem:[#allocation2] sm:$0xff]
        %v255 = vsub.f32 %v235, 1.0
        %v256 = vmul.f32 %v255, 14.285714
        %v257 = vmul.f32 %v256, 1.442695
        %v258 = vpow.pop %v257
        %v259 = vsel %vm253, %v258, 0.0
        %vm260 = vcmask 64512
        %v261 = vsel %vm260, %v259, 0.0
        %262 = vadd.xlane.f32.xlu0 %v261
        %v263 = vpop.xlane.xlu0 %262
        %v264 = vadd.f32 %v254, %v263
        %vm265 = vcmask 7168
        %266 = vst.msk [vmem:[#allocation2] sm:$0xff] %vm265, %v264
        %p267 = scmp.eq.s32.totalorder %s22, 1
        // Predicated region
        $region41: #{tpu_custom_call.1} parent=27 // pred_check
          %p268 = pneg %p267
        $region42: #{tpu_custom_call.1} parent=27 // pred_check_branch
          %270 = sbr.rel (%p268) target = $region44
        $region43: #{tpu_custom_call.1} parent=27 // pred_region
          %v271 = vld [vmem:[#allocation2] sm:$0xff]
          %v272 = vlog2.pop %v271
          %v273 = vmul.f32 %v272, 0.6931472
          %v274 = vadd.f32 %v273, 14.285714
          %275 = vst.msk [vmem:[%s185] sm:$0xff] %vm265, %v274
        $region44: #{tpu_custom_call.1} parent=27 // pred_fallthru
          _
        %p276 = scmp.lt.s32.totalorder %s21, 1
        %s277 = scalar_select %p276, %s21, 1
        %s278 = smul.addr %s277, 8
        %s279 = scalar_lea.vmem %s2, %s278
        // Predicated region
        $region45: #{tpu_custom_call.1} parent=27 // pred_check
          %p280 = pneg %p94
        $region46: #{tpu_custom_call.1} parent=27 // pred_check_branch
          %282 = sbr.rel (%p280) target = $region48
        $region47: #{tpu_custom_call.1} parent=27 // pred_region
          _
        $region48: #{tpu_custom_call.1} parent=27 // pred_fallthru
          _
      $region28: #{tpu_custom_call.1} parent=5 // pred_fallthru
        _
      %p283 = scmp.le.s32.totalorder 2, %s12
      // Predicated region
      $region49: #{tpu_custom_call.1} parent=5 // pred_check
        %p284 = pneg %p283
      $region50: #{tpu_custom_call.1} parent=5 // pred_check_branch
        %286 = sbr.rel (%p284) target = $region52
      $region51: #{tpu_custom_call.1} parent=5 // pred_region
        %s287 = ssub.s32 %s12, 2
        // Predicated region
        $region53: #{tpu_custom_call.1} parent=51 // pred_check
          %p288 = pneg %p100
        $region54: #{tpu_custom_call.1} parent=51 // pred_check_branch
          %290 = sbr.rel (%p288) target = $region56
        $region55: #{tpu_custom_call.1} parent=51 // pred_region
          %p291 = scmp.lt.s32.totalorder %s23, 1
          %s292 = scalar_select %p291, %s23, 1
          %s293 = smul.addr %s292, 8
          %s294 = scalar_lea.vmem %s2, %s293
        $region56: #{tpu_custom_call.1} parent=51 // pred_fallthru
          _
      $region52: #{tpu_custom_call.1} parent=5 // pred_fallthru
        _
    $region6: #{tpu_custom_call.1} parent=1 // loop_footer
      %s16 = sadd.s32 1, %s12
    $region7: #{tpu_custom_call.1} parent=1 // loop_footer_branch
      %11 = sbr.rel target = $region3
    $region8: #{tpu_custom_call.1} parent=1 // loop_exit
      _
    %295 = vsyncpa [#allocation4], 1
    %s296 = scalar_lea.sflag [#allocation4], 1
    %297 = vsyncpa %s296, 1
    %298 = vsyncpa [#allocation6], 1

</llo_original>
